<compile_context>
chip_gen: v5e
topology: v5e:2x2
jax: 0.10.0
libtpu: 0.0.40
codegen_flags: <defaults>
</compile_context>

<pallas_src>
import functools

import jax
import jax.numpy as jnp
from jax.experimental import pallas as pl
from jax.experimental.pallas import tpu as pltpu

LN_EPS = 1e-5      # HF CLIP layer_norm_eps
NEG_INF = -1e30    # finite "minus infinity" so padded rows never produce NaN


# ----------------------------------------------------------------------------- helpers
def _layer_norm(x, g, b):
    """LayerNorm over the last (hidden) axis. Pure jnp -> usable in-kernel and as ref."""
    mu = jnp.mean(x, axis=-1, keepdims=True)
    var = jnp.mean(jnp.square(x - mu), axis=-1, keepdims=True)
    return (x - mu) * jax.lax.rsqrt(var + LN_EPS) * g + b


def _patchify(images, patch_size):
    """[B, C, H, W] -> [B, num_patches, C*ps*ps] (matches Conv2d-as-matmul layout)."""
    B, C, H, W = images.shape
    hp, wp = H // patch_size, W // patch_size
    x = images.reshape(B, C, hp, patch_size, wp, patch_size)
    x = x.transpose(0, 2, 4, 1, 3, 5)          # B, hp, wp, C, ps, ps
    return x.reshape(B, hp * wp, C * patch_size * patch_size)


def _rep_spec(arr):
    """BlockSpec presenting the full array at every grid step (resident weights)."""
    n = arr.ndim
    return pl.BlockSpec(arr.shape, lambda b, n=n: (0,) * n)


def _round_up(x, m):
    return ((x + m - 1) // m) * m


# ----------------------------------------------------------------------------- kernels
def _embed_kernel(patch_ref, w_ref, clspos_ref, pospatch_ref, g_ref, b_ref, o_ref,
                  *, num_patches, num_tokens):
    """Patch-embed matmul + pos add + pre-LayerNorm for one batch element.

    Layout convention: rows [0, P) are patch tokens, row P is the CLS token,
    rows [num_tokens, S_pad) are zero padding (masked out of attention later).
    """
    P = num_patches
    S_pad, D = o_ref.shape[1], o_ref.shape[2]
    g, b = g_ref[...], b_ref[...]
    pe = jnp.dot(patch_ref[0], w_ref[...], preferred_element_type=jnp.float32)   # (P, D)
    # Big patch store starts at sublane offset 0 (CLS lives on the last real row).
    o_ref[0, pl.ds(0, P), :] = _layer_norm(pe + pospatch_ref[...], g, b)
    o_ref[0, pl.ds(P, 1), :] = _layer_norm(clspos_ref[...], g, b)
    if S_pad > num_tokens:   # zero-fill padded rows (finite values; masked in attention)
        o_ref[0, pl.ds(num_tokens, S_pad - num_tokens), :] = jnp.zeros(
            (S_pad - num_tokens, D), jnp.float32)


def _encoder_stack_kernel(x_ref,
                          ln1_g_ref, ln1_b_ref, wqkv_ref, bqkv_ref, wo_ref, bo_ref,
                          ln2_g_ref, ln2_b_ref, w1_ref, b1_ref, w2_ref, b2_ref,
                          o_ref, *, num_heads, head_dim, num_tokens):
    """One CLIP encoder layer; grid=(B, L) with activations resident in o_ref over L."""
    @pl.when(pl.program_id(1) == 0)
    def _():
        o_ref[...] = x_ref[...]          # load embeddings into the resident accumulator

    x = o_ref[0]                         # (S_pad, D) current activations (VMEM-resident)
    S_pad, D = x.shape
    H, Dh = num_heads, head_dim
    scale = Dh ** -0.5

    # ---- self-attention sub-block --------------------------------------------------
    h = _layer_norm(x, ln1_g_ref[0], ln1_b_ref[0])
    # Fused QKV projection: one MXU op with N = 3D instead of three N = D matmuls.
    qkv = jnp.dot(h, wqkv_ref[0], preferred_element_type=jnp.float32) + bqkv_ref[0]

    key_mask = None
    if num_tokens < S_pad:               # padded key columns must get zero attention
        key_mask = jax.lax.broadcasted_iota(jnp.int32, (S_pad, S_pad), 1) < num_tokens

    # TODO(synk): for real CLIP sizes (16 heads, head_dim 64) switch this static unroll
    #             to lax.fori_loop / a batched-head einsum to bound vreg live ranges.
    ctx_heads = []
    for hd in range(H):
        lo = hd * Dh
        qh = qkv[:, lo:lo + Dh] * scale                     # bias scaled too (matches HF)
        kh = qkv[:, D + lo:D + lo + Dh]
        vh = qkv[:, 2 * D + lo:2 * D + lo + Dh]
        s = jnp.dot(qh, kh.T, preferred_element_type=jnp.float32)       # (S_pad, S_pad)
        if key_mask is not None:
            s = jnp.where(key_mask, s, NEG_INF)
        s = s - jnp.max(s, axis=-1, keepdims=True)
        p = jnp.exp(s)
        p = p * pl.reciprocal(jnp.sum(p, axis=-1, keepdims=True), approx=True)
        ctx_heads.append(jnp.dot(p, vh, preferred_element_type=jnp.float32))
    ctx = jnp.concatenate(ctx_heads, axis=-1)               # (S_pad, D)
    # Single MXU-shaped (K = D) output projection after the head loop.
    x = x + jnp.dot(ctx, wo_ref[0], preferred_element_type=jnp.float32) + bo_ref[0]

    # ---- MLP sub-block (quick_gelu) ------------------------------------------------
    h = _layer_norm(x, ln2_g_ref[0], ln2_b_ref[0])
    h = jnp.dot(h, w1_ref[0], preferred_element_type=jnp.float32) + b1_ref[0]
    h = h * jax.nn.sigmoid(1.702 * h)
    h = jnp.dot(h, w2_ref[0], preferred_element_type=jnp.float32) + b2_ref[0]
    o_ref[0] = x + h


# ----------------------------------------------------------------------------- wrappers
def _embed(patches, w_patch, cls_plus_pos, pos_patch, g, b, seq_pad):
    B, P, Cpp = patches.shape
    D = w_patch.shape[1]
    kernel = functools.partial(_embed_kernel, num_patches=P, num_tokens=P + 1)
    reps = [_rep_spec(a) for a in (w_patch, cls_plus_pos, pos_patch, g, b)]
    return pl.pallas_call(
        kernel,
        out_shape=jax.ShapeDtypeStruct((B, seq_pad, D), jnp.float32),
        grid=(B,),
        in_specs=[pl.BlockSpec((1, P, Cpp), lambda i: (i, 0, 0))] + reps,
        out_specs=pl.BlockSpec((1, seq_pad, D), lambda i: (i, 0, 0)),
        compiler_params=pltpu.CompilerParams(dimension_semantics=("parallel",)),
    )(patches, w_patch, cls_plus_pos, pos_patch, g, b)


def _encoder_stack(x, stacked, num_heads, head_dim, num_tokens):
    """All encoder layers in one pallas_call; activations stay in VMEM across layers."""
    B, S_pad, D = x.shape
    L = stacked[0].shape[0]
    F = stacked[8].shape[2]              # w1 is (L, D, F)

    kernel = functools.partial(_encoder_stack_kernel, num_heads=num_heads,
                               head_dim=head_dim, num_tokens=num_tokens)

    in_specs = [pl.BlockSpec((1, S_pad, D), lambda b, l: (b, 0, 0))]     # x: resident per b
    for arr in stacked:                                                  # weights: indexed by l
        in_specs.append(pl.BlockSpec((1,) + arr.shape[1:], lambda b, l: (l, 0, 0)))

    flops = 2 * B * L * S_pad * (4 * D * D + 2 * D * F + 2 * S_pad * D)
    transcendentals = B * L * S_pad * (num_heads * S_pad + F)
    bytes_accessed = 4 * (B * sum(int(a.size) for a in stacked) + 2 * B * S_pad * D)

    # TODO(synk): for real CLIP-L on v7x (64 MiB VMEM) also set vmem_limit_bytes and,
    #             if still tight, split fc1/fc2 over an inner grid axis; the toy shapes
    #             here fit the default scoped-VMEM budget comfortably.
    return pl.pallas_call(
        kernel,
        out_shape=jax.ShapeDtypeStruct((B, S_pad, D), jnp.float32),
        grid=(B, L),
        in_specs=in_specs,
        out_specs=pl.BlockSpec((1, S_pad, D), lambda b, l: (b, 0, 0)),   # constant over L
        compiler_params=pltpu.CompilerParams(
            dimension_semantics=("parallel", "arbitrary")),
        cost_estimate=pl.CostEstimate(flops=flops, transcendentals=transcendentals,
                                      bytes_accessed=bytes_accessed),
    )(x, *stacked)


# ----------------------------------------------------------------------------- module
class CLIPVisionTowerPallas:
    """Pallas re-implementation of CLIPVisionTower (select_layer=-1, select_feature='patch')."""

    _PARAM_NAMES = ("ln1_g", "ln1_b", "wqkv", "bqkv", "wo", "bo",
                    "ln2_g", "ln2_b", "w1", "b1", "w2", "b2")

    def __init__(self, key, *, image_size=16, patch_size=8, in_channels=3,
                 hidden_size=32, num_heads=4, mlp_dim=64, num_layers=2):
        assert hidden_size % num_heads == 0
        self.image_size, self.patch_size, self.in_channels = image_size, patch_size, in_channels
        self.hidden_size, self.num_heads = hidden_size, num_heads
        self.head_dim = hidden_size // num_heads
        self.mlp_dim, self.num_layers = mlp_dim, num_layers
        self.select_layer = -1
        self.select_feature = "patch"
        self.num_patches = (image_size // patch_size) ** 2
        self.num_positions = self.num_patches + 1
        self.num_tokens = self.num_positions
        self.seq_pad = _round_up(self.num_tokens, 8)   # sublane-aligned sequence length
        # TODO(synk): load_model() pulls pretrained HF CLIP weights; weights are randomly
        #             initialized in-script (no file / network access allowed).
        # TODO(synk): resize_pos() bicubic-resizes the pretrained position table at init
        #             time (weight surgery, not forward compute); the table here is sized
        #             directly for this patch grid instead.
        keys = iter(jax.random.split(key, 256))
        D, F, Cpp = hidden_size, mlp_dim, in_channels * patch_size * patch_size
        s = 0.05
        nrm = lambda shape, scale=s: scale * jax.random.normal(next(keys), shape, dtype=jnp.float32)

        self.w_patch = nrm((Cpp, D))
        self.cls_emb = nrm((1, D))
        self.pos_emb = nrm((self.num_positions, D))
        self.pre_ln_g = 1.0 + nrm((1, D), 0.02)
        self.pre_ln_b = nrm((1, D), 0.02)
        # Precompute the pos-embedding split / CLS+pos add once (no in-kernel row slices).
        self.cls_plus_pos = self.cls_emb + self.pos_emb[0:1]
        self.pos_patch = self.pos_emb[1:]

        per_layer = []
        for _ in range(num_layers):
            wq, bq = nrm((D, D)), nrm((1, D))
            wk, bk = nrm((D, D)), nrm((1, D))
            wv, bv = nrm((D, D)), nrm((1, D))
            per_layer.append(dict(
                ln1_g=1.0 + nrm((1, D), 0.02), ln1_b=nrm((1, D), 0.02),
                wqkv=jnp.concatenate([wq, wk, wv], axis=1),        # (D, 3D) fused QKV
                bqkv=jnp.concatenate([bq, bk, bv], axis=1),        # (1, 3D)
                wo=nrm((D, D)), bo=nrm((1, D)),
                ln2_g=1.0 + nrm((1, D), 0.02), ln2_b=nrm((1, D), 0.02),
                w1=nrm((D, F)), b1=nrm((1, F)),
                w2=nrm((F, D)), b2=nrm((1, D)),
            ))
        # Stack per-layer params into (L, ...) arrays for the fused encoder-stack call.
        # TODO(synk): for v6e/v7x production, store these in bfloat16 (keep f32 accumulation
        #             and f32 LN/softmax statistics); kept f32 here for the numerical test.
        self.stacked = tuple(jnp.stack([lp[n] for lp in per_layer], axis=0)
                             for n in self._PARAM_NAMES)
        self.is_loaded = True
        self.is_resize_pos = True

    # --- mirrors CLIPVisionTower.feature_select (CLS is on the LAST real row here) ---
    def feature_select(self, hidden_state):
        P = self.num_patches
        if self.select_feature == "patch":
            return hidden_state[:, :P]
        elif self.select_feature == "cls_patch":
            return jnp.concatenate(
                [hidden_state[:, P:P + 1], hidden_state[:, :P]], axis=1)
        raise ValueError(f"Unexpected select feature: {self.select_feature}")

    def _forward_batched(self, images):
        images = images.astype(jnp.float32)
        patches = _patchify(images, self.patch_size)
        x = _embed(patches, self.w_patch, self.cls_plus_pos, self.pos_patch,
                   self.pre_ln_g, self.pre_ln_b, self.seq_pad)
        # select_layer == -1 -> only the final hidden state is needed.
        x = _encoder_stack(x, self.stacked, self.num_heads, self.head_dim, self.num_tokens)
        return self.feature_select(x)

    def __call__(self, images):
        if isinstance(images, (list, tuple)):    # mirrors the list path of the torch forward
            shapes = {tuple(img.shape) for img in images}
            if len(shapes) == 1:
                # Stack equal-shaped images into one batched call (keeps both v7x TCs busy),
                # then return per-image batch-1 features like the torch list path.
                feats = self._forward_batched(jnp.stack(list(images), axis=0))
                return [feats[i:i + 1].astype(images[i].dtype) for i in range(len(images))]
            return [self._forward_batched(img[None]).astype(img.dtype) for img in images]
        return self._forward_batched(images).astype(images.dtype)


# ----------------------------------------------------------------------------- pure-JAX reference
def _ref_forward(tower, images):
    """HIGHEST-precision reference in the canonical HF layout (CLS first, no padding)."""
    prec = jax.lax.Precision.HIGHEST
    images = images.astype(jnp.float32)
    patches = _patchify(images, tower.patch_size)
    pe = jnp.einsum("bpc,cd->bpd", patches, tower.w_patch, precision=prec)
    B = images.shape[0]
    D, H = tower.hidden_size, tower.num_heads
    Dh = D // H
    cls = jnp.broadcast_to(tower.cls_emb[None], (B, 1, D))
    x = jnp.concatenate([cls, pe], axis=1) + tower.pos_emb[None]
    x = _layer_norm(x, tower.pre_ln_g, tower.pre_ln_b)

    (ln1_g, ln1_b, wqkv, bqkv, wo, bo, ln2_g, ln2_b, w1, b1, w2, b2) = tower.stacked
    S = x.shape[1]
    for l in range(tower.num_layers):
        h = _layer_norm(x, ln1_g[l], ln1_b[l])
        qkv = jnp.einsum("bsd,de->bse", h, wqkv[l], precision=prec) + bqkv[l]
        q = (qkv[..., :D] * (Dh ** -0.5)).reshape(B, S, H, Dh)
        k = qkv[..., D:2 * D].reshape(B, S, H, Dh)
        v = qkv[..., 2 * D:].reshape(B, S, H, Dh)
        s = jnp.einsum("bqhd,bkhd->bhqk", q, k, precision=prec)
        p = jax.nn.softmax(s, axis=-1)
        ctx = jnp.einsum("bhqk,bkhd->bqhd", p, v, precision=prec).reshape(B, S, D)
        x = x + jnp.einsum("bsd,de->bse", ctx, wo[l], precision=prec) + bo[l]
        h = _layer_norm(x, ln2_g[l], ln2_b[l])
        h = jnp.einsum("bsd,df->bsf", h, w1[l], precision=prec) + b1[l]
        h = h * jax.nn.sigmoid(1.702 * h)
        h = jnp.einsum("bsf,fd->bsd", h, w2[l], precision=prec) + b2[l]
        x = x + h
    return x[:, 1:]      # 'patch' select in the CLS-first layout


# ----------------------------------------------------------------------------- test
if __name__ == "__main__":
    key = jax.random.PRNGKey(0)
    tower = CLIPVisionTowerPallas(key, image_size=16, patch_size=8, in_channels=3,
                                  hidden_size=32, num_heads=4, mlp_dim=64, num_layers=2)
    images = jax.random.normal(jax.random.fold_in(key, 123), (2, 3, 16, 16), dtype=jnp.float32)

    feats = tower(images)
    jax.block_until_ready(feats)
    assert feats.shape == (2, tower.num_patches, tower.hidden_size), feats.shape
    assert feats.dtype == images.dtype

    ref = _ref_forward(tower, images)
    max_err = float(jnp.max(jnp.abs(feats - ref)))
    assert jnp.allclose(feats, ref, atol=1e-2, rtol=1e-2), max_err

    # list-input path (equal shapes -> stacked into one batched call, split afterwards)
    feats_list = tower([images[0], images[1]])
    assert isinstance(feats_list, list) and feats_list[0].shape == (1, 4, 32)
    stacked_list = jnp.concatenate(feats_list, axis=0)
    assert jnp.allclose(stacked_list, feats, atol=1e-5, rtol=1e-5)

    print("KERNEL_OK")
</pallas_src>

<mosaic_0001>
module attributes {stable_mosaic.version = 11 : i64} {
  func.func @_embed_kernel(%arg0: i32, %arg1: memref<1x4x192xf32, #tpu.memory_space<vmem>>, %arg2: memref<192x32xf32, #tpu.memory_space<vmem>>, %arg3: memref<1x32xf32, #tpu.memory_space<vmem>>, %arg4: memref<4x32xf32, #tpu.memory_space<vmem>>, %arg5: memref<1x32xf32, #tpu.memory_space<vmem>>, %arg6: memref<1x32xf32, #tpu.memory_space<vmem>>, %arg7: memref<1x8x32xf32, #tpu.memory_space<vmem>>) attributes {dimension_semantics = [#tpu.dimension_semantics<parallel>], iteration_bounds = array<i64: 2>, scalar_prefetch = 0 : i64, scratch_operands = 0 : i64, tpu.core_type = #tpu.core_type<tc>, window_params = [{transform_indices = @transform_0, window_bounds = array<i64: 1, 4, 192>}, {pipeline_mode = #tpu.pipeline_mode<synchronous>, transform_indices = @transform_1, window_bounds = array<i64: 192, 32>}, {pipeline_mode = #tpu.pipeline_mode<synchronous>, transform_indices = @transform_2, window_bounds = array<i64: 1, 32>}, {pipeline_mode = #tpu.pipeline_mode<synchronous>, transform_indices = @transform_3, window_bounds = array<i64: 4, 32>}, {pipeline_mode = #tpu.pipeline_mode<synchronous>, transform_indices = @transform_4, window_bounds = array<i64: 1, 32>}, {pipeline_mode = #tpu.pipeline_mode<synchronous>, transform_indices = @transform_5, window_bounds = array<i64: 1, 32>}, {transform_indices = @transform_6, window_bounds = array<i64: 1, 8, 32>}]} {
    %c0 = arith.constant 0 : index
    %c0_0 = arith.constant 0 : index
    %0 = vector.load %arg5[%c0, %c0_0] : memref<1x32xf32, #tpu.memory_space<vmem>>, vector<1x32xf32>
    %c0_1 = arith.constant 0 : index
    %c0_2 = arith.constant 0 : index
    %1 = vector.load %arg6[%c0_1, %c0_2] : memref<1x32xf32, #tpu.memory_space<vmem>>, vector<1x32xf32>
    %c0_3 = arith.constant 0 : index
    %c0_4 = arith.constant 0 : index
    %c0_5 = arith.constant 0 : index
    %2 = vector.load %arg1[%c0_3, %c0_4, %c0_5] : memref<1x4x192xf32, #tpu.memory_space<vmem>>, vector<1x4x192xf32>
    %3 = vector.shape_cast %2 : vector<1x4x192xf32> to vector<4x192xf32>
    %c0_6 = arith.constant 0 : index
    %c0_7 = arith.constant 0 : index
    %4 = vector.load %arg2[%c0_6, %c0_7] : memref<192x32xf32, #tpu.memory_space<vmem>>, vector<192x32xf32>
    %cst = arith.constant dense<0.000000e+00> : vector<4x32xf32>
    %5 = tpu.matmul %3, %4, %cst {dimension_numbers = #tpu.dot_dimension_numbers<[1], [0], [0], [1], [0, 0, 1, 1], [], []>} : vector<4x192xf32>, vector<192x32xf32>, vector<4x32xf32> -> vector<4x32xf32>
    %c0_8 = arith.constant 0 : index
    %c0_9 = arith.constant 0 : index
    %6 = vector.load %arg4[%c0_8, %c0_9] : memref<4x32xf32, #tpu.memory_space<vmem>>, vector<4x32xf32>
    %7 = arith.addf %5, %6 : vector<4x32xf32>
    %cst_10 = arith.constant dense<0.000000e+00> : vector<4xf32>
    %8 = vector.multi_reduction <add>, %7, %cst_10 [1] : vector<4x32xf32> to vector<4xf32>
    %9 = vector.shape_cast %8 : vector<4xf32> to vector<4x1xf32>
    %cst_11 = arith.constant 3.200000e+01 : f32
    %10 = vector.broadcast %cst_11 : f32 to vector<4x1xf32>
    %11 = arith.divf %9, %10 : vector<4x1xf32>
    %12 = vector.broadcast %11 : vector<4x1xf32> to vector<4x32xf32>
    %13 = arith.subf %7, %12 : vector<4x32xf32>
    %14 = arith.mulf %13, %13 : vector<4x32xf32>
    %cst_12 = arith.constant dense<0.000000e+00> : vector<4xf32>
    %15 = vector.multi_reduction <add>, %14, %cst_12 [1] : vector<4x32xf32> to vector<4xf32>
    %16 = vector.shape_cast %15 : vector<4xf32> to vector<4x1xf32>
    %cst_13 = arith.constant 3.200000e+01 : f32
    %17 = vector.broadcast %cst_13 : f32 to vector<4x1xf32>
    %18 = arith.divf %16, %17 : vector<4x1xf32>
    %19 = vector.broadcast %11 : vector<4x1xf32> to vector<4x32xf32>
    %20 = arith.subf %7, %19 : vector<4x32xf32>
    %cst_14 = arith.constant 9.99999974E-6 : f32
    %21 = vector.broadcast %cst_14 : f32 to vector<4x1xf32>
    %22 = arith.addf %18, %21 : vector<4x1xf32>
    %23 = math.rsqrt %22 : vector<4x1xf32>
    %24 = vector.broadcast %23 : vector<4x1xf32> to vector<4x32xf32>
    %25 = arith.mulf %20, %24 : vector<4x32xf32>
    %26 = vector.broadcast %0 : vector<1x32xf32> to vector<4x32xf32>
    %27 = arith.mulf %25, %26 : vector<4x32xf32>
    %28 = vector.broadcast %1 : vector<1x32xf32> to vector<4x32xf32>
    %29 = arith.addf %27, %28 : vector<4x32xf32>
    %c0_15 = arith.constant 0 : index
    %c0_16 = arith.constant 0 : index
    %c0_17 = arith.constant 0 : index
    %30 = vector.load %arg7[%c0_15, %c0_16, %c0_17] : memref<1x8x32xf32, #tpu.memory_space<vmem>>, vector<1x4x32xf32>
    %31 = vector.shape_cast %30 : vector<1x4x32xf32> to vector<4x32xf32>
    %32 = vector.shape_cast %29 : vector<4x32xf32> to vector<1x4x32xf32>
    tpu.vector_store %arg7[%c0_15, %c0_16, %c0_17], %32 {strides = array<i32>} : memref<1x8x32xf32, #tpu.memory_space<vmem>>, vector<1x4x32xf32>,
    %c0_18 = arith.constant 0 : index
    %c0_19 = arith.constant 0 : index
    %33 = vector.load %arg3[%c0_18, %c0_19] : memref<1x32xf32, #tpu.memory_space<vmem>>, vector<1x32xf32>
    %cst_20 = arith.constant dense<0.000000e+00> : vector<1xf32>
    %34 = vector.multi_reduction <add>, %33, %cst_20 [1] : vector<1x32xf32> to vector<1xf32>
    %35 = vector.shape_cast %34 : vector<1xf32> to vector<1x1xf32>
    %cst_21 = arith.constant 3.200000e+01 : f32
    %36 = vector.broadcast %cst_21 : f32 to vector<1x1xf32>
    %37 = arith.divf %35, %36 : vector<1x1xf32>
    %38 = vector.broadcast %37 : vector<1x1xf32> to vector<1x32xf32>
    %39 = arith.subf %33, %38 : vector<1x32xf32>
    %40 = arith.mulf %39, %39 : vector<1x32xf32>
    %cst_22 = arith.constant dense<0.000000e+00> : vector<1xf32>
    %41 = vector.multi_reduction <add>, %40, %cst_22 [1] : vector<1x32xf32> to vector<1xf32>
    %42 = vector.shape_cast %41 : vector<1xf32> to vector<1x1xf32>
    %cst_23 = arith.constant 3.200000e+01 : f32
    %43 = vector.broadcast %cst_23 : f32 to vector<1x1xf32>
    %44 = arith.divf %42, %43 : vector<1x1xf32>
    %45 = vector.broadcast %37 : vector<1x1xf32> to vector<1x32xf32>
    %46 = arith.subf %33, %45 : vector<1x32xf32>
    %cst_24 = arith.constant 9.99999974E-6 : f32
    %47 = vector.broadcast %cst_24 : f32 to vector<1x1xf32>
    %48 = arith.addf %44, %47 : vector<1x1xf32>
    %49 = math.rsqrt %48 : vector<1x1xf32>
    %50 = vector.broadcast %49 : vector<1x1xf32> to vector<1x32xf32>
    %51 = arith.mulf %46, %50 : vector<1x32xf32>
    %52 = arith.mulf %51, %0 : vector<1x32xf32>
    %53 = arith.addf %52, %1 : vector<1x32xf32>
    %c0_25 = arith.constant 0 : index
    %c4 = arith.constant 4 : index
    %c0_26 = arith.constant 0 : index
    %54 = vector.load %arg7[%c0_25, %c4, %c0_26] : memref<1x8x32xf32, #tpu.memory_space<vmem>>, vector<1x1x32xf32>
    %55 = vector.shape_cast %54 : vector<1x1x32xf32> to vector<1x32xf32>
    %56 = vector.shape_cast %53 : vector<1x32xf32> to vector<1x1x32xf32>
    tpu.vector_store %arg7[%c0_25, %c4, %c0_26], %56 {strides = array<i32>} : memref<1x8x32xf32, #tpu.memory_space<vmem>>, vector<1x1x32xf32>,
    %cst_27 = arith.constant 0.000000e+00 : f32
    %57 = vector.broadcast %cst_27 : f32 to vector<3x32xf32>
    %c0_28 = arith.constant 0 : index
    %c5 = arith.constant 5 : index
    %c0_29 = arith.constant 0 : index
    %58 = vector.load %arg7[%c0_28, %c5, %c0_29] : memref<1x8x32xf32, #tpu.memory_space<vmem>>, vector<1x3x32xf32>
    %59 = vector.shape_cast %58 : vector<1x3x32xf32> to vector<3x32xf32>
    %60 = vector.shape_cast %57 : vector<3x32xf32> to vector<1x3x32xf32>
    tpu.vector_store %arg7[%c0_28, %c5, %c0_29], %60 {strides = array<i32>} : memref<1x8x32xf32, #tpu.memory_space<vmem>>, vector<1x3x32xf32>,
    return
  }
  func.func @transform_0(%arg0: i32) -> (i32, i32, i32) {
    %c0_i32 = arith.constant 0 : i32
    %c0_i32_0 = arith.constant 0 : i32
    %c0_i32_1 = arith.constant 0 : i32
    return %arg0, %c0_i32, %c0_i32_0 : i32, i32, i32
  }
  func.func @transform_1(%arg0: i32) -> (i32, i32) {
    %c0_i32 = arith.constant 0 : i32
    %c0_i32_0 = arith.constant 0 : i32
    %c0_i32_1 = arith.constant 0 : i32
    return %c0_i32, %c0_i32_0 : i32, i32
  }
  func.func @transform_2(%arg0: i32) -> (i32, i32) {
    %c0_i32 = arith.constant 0 : i32
    %c0_i32_0 = arith.constant 0 : i32
    %c0_i32_1 = arith.constant 0 : i32
    return %c0_i32, %c0_i32_0 : i32, i32
  }
  func.func @transform_3(%arg0: i32) -> (i32, i32) {
    %c0_i32 = arith.constant 0 : i32
    %c0_i32_0 = arith.constant 0 : i32
    %c0_i32_1 = arith.constant 0 : i32
    return %c0_i32, %c0_i32_0 : i32, i32
  }
  func.func @transform_4(%arg0: i32) -> (i32, i32) {
    %c0_i32 = arith.constant 0 : i32
    %c0_i32_0 = arith.constant 0 : i32
    %c0_i32_1 = arith.constant 0 : i32
    return %c0_i32, %c0_i32_0 : i32, i32
  }
  func.func @transform_5(%arg0: i32) -> (i32, i32) {
    %c0_i32 = arith.constant 0 : i32
    %c0_i32_0 = arith.constant 0 : i32
    %c0_i32_1 = arith.constant 0 : i32
    return %c0_i32, %c0_i32_0 : i32, i32
  }
  func.func @transform_6(%arg0: i32) -> (i32, i32, i32) {
    %c0_i32 = arith.constant 0 : i32
    %c0_i32_0 = arith.constant 0 : i32
    %c0_i32_1 = arith.constant 0 : i32
    return %arg0, %c0_i32, %c0_i32_0 : i32, i32, i32
  }
}

</mosaic_0001>

<llo_original>
// kernel: tpu_custom_call.1
$region0: #{tpu_custom_call.1}
  #allocation0 [shape = 'u32[]', space=smem, size = 0x4, offset = 0x4, fixed_abs, tag = 'smem constant byte address 0x4 - core index']
  #allocation1 [shape = 'u32[72,128]{1,0:T(1,128)}', space=vmem, size = 0x9000, scoped, tag = 'internal scratch']
  %s0 = inlined_call_operand.vmem [shape: f32[2,4,192], index: 0, kind: input, shape index: {}]
  %s1 = inlined_call_operand.vmem [shape: f32[192,32], index: 1, kind: input, shape index: {}]
  %s2 = inlined_call_operand.vmem [shape: f32[1,32], index: 2, kind: input, shape index: {}]
  %s3 = inlined_call_operand.vmem [shape: f32[4,32], index: 3, kind: input, shape index: {}]
  %s4 = inlined_call_operand.vmem [shape: f32[1,32], index: 4, kind: input, shape index: {}]
  %s5 = inlined_call_operand.vmem [shape: f32[1,32], index: 5, kind: input, shape index: {}]
  %s6 = inlined_call_operand.hbm [shape: f32[2,8,32], index: 6, kind: output, shape index: {}]
  %s7 = sld [smem:[#allocation0]]
  $region57: #{tpu_custom_call.1} parent=0
    _
  %s9 = ssub.s32 1, %s7
  %s10 = scalar_select 0, %s9, %s7
  $region1: #{tpu_custom_call.1} parent=0
    #allocation2 [shape = 'u8[8192]{0}', space=vmem, size = 0x2000, scoped, tag = 'output window, operand 0']
    #allocation3 [shape = 's32[2]{0}', space=sflag, size = 0x8, scoped, tag = 'scoped memory for tpu_custom_call.1']
    %11 = vsyncpa [#allocation3], 0
    %s12 = scalar_lea.sflag [#allocation3], 1
    %13 = vsyncpa %s12, 0
    loop: start=0, step=1, limit=4
    $region2: #{tpu_custom_call.1} parent=1 // loop_pre_header
      _
    $region3: #{tpu_custom_call.1} parent=1 // loop_header
      %s15 = sphi 0, %s19
      %p16 = scmp.ge.s32.totalorder %s15, 4
      %s25 = sphi 0, %s27
      %s28 = sphi 0, %s25
      %s29 = sphi 0, %s28
      %s45 = sphi 0, %s29
      %s49 = sphi 0, %s49
      %s51 = sphi 0, %s49
      %s52 = sphi 0, %s51
      %s66 = sphi 0, %s52
      %s70 = sphi 0, %s70
      %s72 = sphi 0, %s70
      %s73 = sphi 0, %s72
      %s87 = sphi 0, %s73
      %s91 = sphi 0, %s91
      %s93 = sphi 0, %s91
      %s94 = sphi 0, %s93
      %s108 = sphi 0, %s94
      %s112 = sphi 0, %s112
      %s114 = sphi 0, %s112
      %s115 = sphi 0, %s114
      %s129 = sphi 0, %s115
      %s133 = sphi 0, %s133
      %s135 = sphi 0, %s133
      %s136 = sphi 0, %s135
      %s150 = sphi 0, %s136
      %s156 = sphi 0, %s158
      %s159 = sphi 0, %s156
      %s160 = sphi 0, %s159
      %s176 = sphi 0, %s160
    $region4: #{tpu_custom_call.1} parent=1 // loop_header_branch
      %18 = sbr.rel (%p16) target = $region8
    $region5: #{tpu_custom_call.1} parent=1 // loop_body
      %s20 = ssub.s32 %s15, 1
      %s21 = ssub.s32 %s15, 2
      %s22 = sadd.s32 %s15, 1
      %s23 = ssub.s32 %s15, %s22
      %p24 = scmp.eq.s32.totalorder %s23, 0
      %s26 = sadd.s32 %s25, 1
      %s27 = scalar_select %p24, %s25, %s26
      %p30 = pneg %p24
      %p31 = scmp.eq.s32.totalorder %s15, 1
      %p32 = por %p30, %p31
      %p33 = scmp.ne.s32.totalorder %s25, %s28
      %p34 = scmp.eq.s32.totalorder %s15, 0
      %p35 = por %p33, %p34
      %p36 = scmp.ne.s32.totalorder %s25, %s28
      %p37 = scmp.eq.s32.totalorder %s20, 1
      %p38 = por %p36, %p37
      %p39 = scmp.ne.s32.totalorder %s28, %s29
      %p40 = scmp.eq.s32.totalorder %s20, 0
      %p41 = por %p39, %p40
      %p42 = scmp.ne.s32.totalorder %s28, %s29
      %p43 = scmp.eq.s32.totalorder %s21, 1
      %p44 = por %p42, %p43
      %p46 = scmp.ne.s32.totalorder %s29, %s45
      %p47 = scmp.eq.s32.totalorder %s21, 0
      %p48 = por %p46, %p47
      %s50 = sadd.s32 %s49, 1
      %p53 = scmp.eq.s32.totalorder %s15, 1
      %p54 = scmp.ne.s32.totalorder %s49, %s51
      %p55 = scmp.eq.s32.totalorder %s15, 0
      %p56 = por %p54, %p55
      %p57 = scmp.ne.s32.totalorder %s49, %s51
      %p58 = scmp.eq.s32.totalorder %s20, 1
      %p59 = por %p57, %p58
      %p60 = scmp.ne.s32.totalorder %s51, %s52
      %p61 = scmp.eq.s32.totalorder %s20, 0
      %p62 = por %p60, %p61
      %p63 = scmp.ne.s32.totalorder %s51, %s52
      %p64 = scmp.eq.s32.totalorder %s21, 1
      %p65 = por %p63, %p64
      %p67 = scmp.ne.s32.totalorder %s52, %s66
      %p68 = scmp.eq.s32.totalorder %s21, 0
      %p69 = por %p67, %p68
      %s71 = sadd.s32 %s70, 1
      %p74 = scmp.eq.s32.totalorder %s15, 1
      %p75 = scmp.ne.s32.totalorder %s70, %s72
      %p76 = scmp.eq.s32.totalorder %s15, 0
      %p77 = por %p75, %p76
      %p78 = scmp.ne.s32.totalorder %s70, %s72
      %p79 = scmp.eq.s32.totalorder %s20, 1
      %p80 = por %p78, %p79
      %p81 = scmp.ne.s32.totalorder %s72, %s73
      %p82 = scmp.eq.s32.totalorder %s20, 0
      %p83 = por %p81, %p82
      %p84 = scmp.ne.s32.totalorder %s72, %s73
      %p85 = scmp.eq.s32.totalorder %s21, 1
      %p86 = por %p84, %p85
      %p88 = scmp.ne.s32.totalorder %s73, %s87
      %p89 = scmp.eq.s32.totalorder %s21, 0
      %p90 = por %p88, %p89
      %s92 = sadd.s32 %s91, 1
      %p95 = scmp.eq.s32.totalorder %s15, 1
      %p96 = scmp.ne.s32.totalorder %s91, %s93
      %p97 = scmp.eq.s32.totalorder %s15, 0
      %p98 = por %p96, %p97
      %p99 = scmp.ne.s32.totalorder %s91, %s93
      %p100 = scmp.eq.s32.totalorder %s20, 1
      %p101 = por %p99, %p100
      %p102 = scmp.ne.s32.totalorder %s93, %s94
      %p103 = scmp.eq.s32.totalorder %s20, 0
      %p104 = por %p102, %p103
      %p105 = scmp.ne.s32.totalorder %s93, %s94
      %p106 = scmp.eq.s32.totalorder %s21, 1
      %p107 = por %p105, %p106
      %p109 = scmp.ne.s32.totalorder %s94, %s108
      %p110 = scmp.eq.s32.totalorder %s21, 0
      %p111 = por %p109, %p110
      %s113 = sadd.s32 %s112, 1
      %p116 = scmp.eq.s32.totalorder %s15, 1
      %p117 = scmp.ne.s32.totalorder %s112, %s114
      %p118 = scmp.eq.s32.totalorder %s15, 0
      %p119 = por %p117, %p118
      %p120 = scmp.ne.s32.totalorder %s112, %s114
      %p121 = scmp.eq.s32.totalorder %s20, 1
      %p122 = por %p120, %p121
      %p123 = scmp.ne.s32.totalorder %s114, %s115
      %p124 = scmp.eq.s32.totalorder %s20, 0
      %p125 = por %p123, %p124
      %p126 = scmp.ne.s32.totalorder %s114, %s115
      %p127 = scmp.eq.s32.totalorder %s21, 1
      %p128 = por %p126, %p127
      %p130 = scmp.ne.s32.totalorder %s115, %s129
      %p131 = scmp.eq.s32.totalorder %s21, 0
      %p132 = por %p130, %p131
      %s134 = sadd.s32 %s133, 1
      %p137 = scmp.eq.s32.totalorder %s15, 1
      %p138 = scmp.ne.s32.totalorder %s133, %s135
      %p139 = scmp.eq.s32.totalorder %s15, 0
      %p140 = por %p138, %p139
      %p141 = scmp.ne.s32.totalorder %s133, %s135
      %p142 = scmp.eq.s32.totalorder %s20, 1
      %p143 = por %p141, %p142
      %p144 = scmp.ne.s32.totalorder %s135, %s136
      %p145 = scmp.eq.s32.totalorder %s20, 0
      %p146 = por %p144, %p145
      %p147 = scmp.ne.s32.totalorder %s135, %s136
      %p148 = scmp.eq.s32.totalorder %s21, 1
      %p149 = por %p147, %p148
      %p151 = scmp.ne.s32.totalorder %s136, %s150
      %p152 = scmp.eq.s32.totalorder %s21, 0
      %p153 = por %p151, %p152
      %s154 = ssub.s32 %s15, %s22
      %p155 = scmp.eq.s32.totalorder %s154, 0
      %s157 = sadd.s32 %s156, 1
      %s158 = scalar_select %p155, %s156, %s157
      %p161 = pneg %p155
      %p162 = scmp.eq.s32.totalorder %s15, 1
      %p163 = por %p161, %p162
      %p164 = scmp.ne.s32.totalorder %s156, %s159
      %p165 = scmp.eq.s32.totalorder %s15, 0
      %p166 = por %p164, %p165
      %p167 = scmp.ne.s32.totalorder %s156, %s159
      %p168 = scmp.eq.s32.totalorder %s20, 1
      %p169 = por %p167, %p168
      %p170 = scmp.ne.s32.totalorder %s159, %s160
      %p171 = scmp.eq.s32.totalorder %s20, 0
      %p172 = por %p170, %p171
      %p173 = scmp.ne.s32.totalorder %s159, %s160
      %p174 = scmp.eq.s32.totalorder %s21, 1
      %p175 = por %p173, %p174
      %p177 = scmp.ne.s32.totalorder %s160, %s176
      %p178 = scmp.eq.s32.totalorder %s21, 0
      %p179 = por %p177, %p178
      %p180 = scmp.le.s32.totalorder 1, %s15
      %p181 = scmp.lt.s32.totalorder %s15, 3
      %p182 = pnand %p180, %p181
      %p183 = pneg %p182
      // Predicated region
      $region9: #{tpu_custom_call.1} parent=5 // pred_check
        _
      $region10: #{tpu_custom_call.1} parent=5 // pred_check_branch
        %185 = sbr.rel (%p182) target = $region12
      $region11: #{tpu_custom_call.1} parent=5 // pred_region
        %s186 = ssub.s32 %s15, 1
        // Predicated region
        $region13: #{tpu_custom_call.1} parent=11 // pred_check
          %p187 = pneg %p62
        $region14: #{tpu_custom_call.1} parent=11 // pred_check_branch
          %189 = sbr.rel (%p187) target = $region16
        $region15: #{tpu_custom_call.1} parent=11 // pred_region
          _
        $region16: #{tpu_custom_call.1} parent=11 // pred_fallthru
          _
        // Predicated region
        $region17: #{tpu_custom_call.1} parent=11 // pred_check
          %p190 = pneg %p83
        $region18: #{tpu_custom_call.1} parent=11 // pred_check_branch
          %192 = sbr.rel (%p190) target = $region20
        $region19: #{tpu_custom_call.1} parent=11 // pred_region
          _
        $region20: #{tpu_custom_call.1} parent=11 // pred_fallthru
          _
        // Predicated region
        $region21: #{tpu_custom_call.1} parent=11 // pred_check
          %p193 = pneg %p104
        $region22: #{tpu_custom_call.1} parent=11 // pred_check_branch
          %195 = sbr.rel (%p193) target = $region24
        $region23: #{tpu_custom_call.1} parent=11 // pred_region
          _
        $region24: #{tpu_custom_call.1} parent=11 // pred_fallthru
          _
        // Predicated region
        $region25: #{tpu_custom_call.1} parent=11 // pred_check
          %p196 = pneg %p125
        $region26: #{tpu_custom_call.1} parent=11 // pred_check_branch
          %198 = sbr.rel (%p196) target = $region28
        $region27: #{tpu_custom_call.1} parent=11 // pred_region
          _
        $region28: #{tpu_custom_call.1} parent=11 // pred_fallthru
          _
        // Predicated region
        $region29: #{tpu_custom_call.1} parent=11 // pred_check
          %p199 = pneg %p146
        $region30: #{tpu_custom_call.1} parent=11 // pred_check_branch
          %201 = sbr.rel (%p199) target = $region32
        $region31: #{tpu_custom_call.1} parent=11 // pred_region
          _
        $region32: #{tpu_custom_call.1} parent=11 // pred_fallthru
          _
      $region12: #{tpu_custom_call.1} parent=5 // pred_fallthru
        _
      %p202 = scmp.lt.s32.totalorder %s15, 2
      // Predicated region
      $region33: #{tpu_custom_call.1} parent=5 // pred_check
        %p203 = pneg %p202
      $region34: #{tpu_custom_call.1} parent=5 // pred_check_branch
        %205 = sbr.rel (%p203) target = $region36
      $region35: #{tpu_custom_call.1} parent=5 // pred_region
        // Predicated region
        $region37: #{tpu_custom_call.1} parent=35 // pred_check
          %p206 = pneg %p35
        $region38: #{tpu_custom_call.1} parent=35 // pred_check_branch
          %208 = sbr.rel (%p206) target = $region40
        $region39: #{tpu_custom_call.1} parent=35 // pred_region
          %p209 = scmp.lt.s32.totalorder %s15, 1
          %s210 = scalar_select %p209, %s15, 1
          %s211 = smul.addr %s210, 2
          %s212 = smul.addr %s211, 4
          %s213 = scalar_lea.vmem %s0, %s212
        $region40: #{tpu_custom_call.1} parent=35 // pred_fallthru
          _
      $region36: #{tpu_custom_call.1} parent=5 // pred_fallthru
        _
      %p214 = scmp.le.s32.totalorder 1, %s15
      %p215 = scmp.lt.s32.totalorder %s15, 3
      %p216 = pnand %p214, %p215
      %p217 = pneg %p216
      // Predicated region
      $region41: #{tpu_custom_call.1} parent=5 // pred_check
        _
      $region42: #{tpu_custom_call.1} parent=5 // pred_check_branch
        %219 = sbr.rel (%p216) target = $region44
      $region43: #{tpu_custom_call.1} parent=5 // pred_region
        %s220 = ssub.s32 %s15, 1
        %p221 = scmp.lt.s32.totalorder %s20, 1
        %s222 = scalar_select %p221, %s20, 1
        %s223 = smul.addr %s222, 2
        %s224 = smul.addr %s223, 4
        %s225 = scalar_lea.vmem %s0, %s224
        %p226 = pneg %p41
        %p227 = pneg %p38
        %p228 = pneg %p62
        %p229 = pneg %p59
        %p230 = pneg %p83
        %p231 = pneg %p80
        %p232 = pneg %p104
        %p233 = pneg %p101
        %p234 = pneg %p125
        %p235 = pneg %p122
        %p236 = pneg %p146
        %p237 = pneg %p143
        %p238 = pneg %p172
        %p239 = pneg %p169
        %s240 = sand.u32 %s159, 1
        %s241 = scalar_lea.sflag [#allocation3], %s240
        %s242 = sand.u32 %s159, 1
        %s243 = smul.addr %s242, 8
        %s244 = scalar_lea.vmem [#allocation2], %s243
        %p245 = scmp.lt.s32.totalorder %s20, 1
        %s246 = scalar_select %p245, %s20, 1
        %s247 = smul.addr %s246, 2
        %s248 = smul.addr %s247, 4
        %s249 = scalar_lea.vmem %s0, %s248
        %v250 = vld [vmem:[%s4] sm:$0x1]
        %v251 = vld [vmem:[%s5] sm:$0x1]
        %v252 = vld [vmem:[%s249] sm:$0xff]
        %v253 = vld [vmem:[%s1] sm:$0xff]
        %v254 = vld [vmem:[%s1 + $0x8] sm:$0xff]
        %v255 = vld [vmem:[%s1 + $0x10] sm:$0xff]
        %v256 = vld [vmem:[%s1 + $0x18] sm:$0xff]
        %v257 = vld [vmem:[%s1 + $0x20] sm:$0xff]
        %v258 = vld [vmem:[%s1 + $0x28] sm:$0xff]
        %v259 = vld [vmem:[%s1 + $0x30] sm:$0xff]
        %v260 = vld [vmem:[%s1 + $0x38] sm:$0xff]
        %v261 = vld [vmem:[%s1 + $0x40] sm:$0xff]
        %v262 = vld [vmem:[%s1 + $0x48] sm:$0xff]
        %v263 = vld [vmem:[%s1 + $0x50] sm:$0xff]
        %v264 = vld [vmem:[%s1 + $0x58] sm:$0xff]
        %v265 = vld [vmem:[%s1 + $0x60] sm:$0xff]
        %v266 = vld [vmem:[%s1 + $0x68] sm:$0xff]
        %v267 = vld [vmem:[%s1 + $0x70] sm:$0xff]
        %v268 = vld [vmem:[%s1 + $0x78] sm:$0xff]
        %v269 = vld [vmem:[%s1 + $0x80] sm:$0xff]
        %v270 = vld [vmem:[%s1 + $0x88] sm:$0xff]
        %v271 = vld [vmem:[%s1 + $0x90] sm:$0xff]
        %v272 = vld [vmem:[%s1 + $0x98] sm:$0xff]
        %v273 = vld [vmem:[%s1 + $0xa0] sm:$0xff]
        %v274 = vld [vmem:[%s1 + $0xa8] sm:$0xff]
        %v275 = vld [vmem:[%s1 + $0xb0] sm:$0xff]
        %v276 = vld [vmem:[%s1 + $0xb8] sm:$0xff]
        %v277 = vld [vmem:[%s3] sm:$0xf]
        %279 = vst [vmem:[#allocation1] ss:$2 sm:$0xff] %v252
        %v280 = vld.sshfl [vmem:[#allocation1] sm:$0xff pattern:$0x75316420]
        %v281 = vld.sshfl [vmem:[#allocation1 + $0x8] sm:$0xff pattern:$0x75316420]
        %vm283 = vcmask 523264
        %v284 = vsel %vm283, %v281, 0
        %286 = vmatpush.msra.mxu0 %v268
        %287 = vmatpush.msra.mxu0 %v267
        %288 = vmatpush.msra.mxu0 %v266
        %289 = vmatpush.msra.mxu0 %v265
        %290 = vmatpush.msra.mxu0 %v264
        %291 = vmatpush.msra.mxu0 %v263
        %292 = vmatpush.msra.mxu0 %v262
        %293 = vmatpush.msra.mxu0 %v261
        %294 = vmatpush.msra.mxu0 %v260
        %295 = vmatpush.msra.mxu0 %v259
        %296 = vmatpush.msra.mxu0 %v258
        %297 = vmatpush.msra.mxu0 %v257
        %298 = vmatpush.msra.mxu0 %v256
        %299 = vmatpush.msra.mxu0 %v255
        %300 = vmatpush.msra.mxu0 %v254
        %301 = vmatpush.msra.mxu0 %v253
        %302 = vmatmul.f32.gmra.mxu0 %v280
        %v303 = vpop.f32.mrf.mxu0
        %v304 = vadd.f32 %v277, %v303
        %305 = vdwg.mxu0
        %306 = vmatpush.msra.mxu0 0.0
        %307 = vmatpush.msra.mxu0 0.0
        %308 = vmatpush.msra.mxu0 0.0
        %309 = vmatpush.msra.mxu0 0.0
        %310 = vmatpush.msra.mxu0 0.0
        %311 = vmatpush.msra.mxu0 0.0
        %312 = vmatpush.msra.mxu0 0.0
        %313 = vmatpush.msra.mxu0 0.0
        %314 = vmatpush.msra.mxu0 %v276
        %315 = vmatpush.msra.mxu0 %v275
        %316 = vmatpush.msra.mxu0 %v274
        %317 = vmatpush.msra.mxu0 %v273
        %318 = vmatpush.msra.mxu0 %v272
        %319 = vmatpush.msra.mxu0 %v271
        %320 = vmatpush.msra.mxu0 %v270
        %321 = vmatpush.msra.mxu0 %v269
        %322 = vmatmul.f32.gmra.mxu0 %v284
        %v323 = vpop.f32.mrf.mxu0
        %v324 = vadd.f32 %v304, %v323
        %325 = vdwg.mxu0
        %vm326 = vcmask 257024
        %v327 = vsel %vm326, %v324, 0.0
        %328 = vadd.xlane.f32.xlu0 %v327
        %v329 = vpop.xlane.xlu0 %328
        %v330 = vrcp.pop 32.0
        %v331 = vmul.f32 32.0, %v330
        %v332 = vsub.f32 1.0, %v331
        %v333 = vmul.f32 %v330, %v332
        %v334 = vadd.f32 %v330, %v333
        %vm335 = vweird.f32 %v330
        %v336 = vsel %vm335, %v330, %v334
        %v337 = vmul.f32 %v329, %v336
        %v338 = vsub.f32 %v324, %v337
        %v339 = vmul.f32 %v338, %v338
        %v340 = vsel %vm326, %v339, 0.0
        %341 = vadd.xlane.f32.xlu0 %v340
        %v342 = vpop.xlane.xlu0 %341
        %v343 = vmul.f32 %v342, %v336
        %v344 = vadd.f32 %v343, 1e-05
        %v345 = vrsqrt.pop %v344
        %v346 = vmul.f32 %v345, %v344
        %v347 = vmul.f32 %v346, %v345
        %v348 = vmul.f32 0.5, %v347
        %v349 = vsub.f32 1.5, %v348
        %v350 = vmul.f32 %v345, %v349
        %vm351 = vweird.f32 %v344
        %vm352 = vweird.f32 %v345
        %vm353 = vmor %vm351, %vm352
        %v354 = vsel %vm353, %v345, %v350
        %v355 = vmul.f32 %v338, %v354
        %v357 = vperm.slane %v250, 0
        %v359 = vmul.f32 %v355, %v357
        %v361 = vperm.slane %v251, 0
        %v363 = vadd.f32 %v359, %v361
        %364 = vst.msk [vmem:[%s244] sm:$0xf] %vm326, %v363
        %v365 = vld [vmem:[%s2] sm:$0x1]
        %vm366 = vcmask 253952
        %v367 = vsel %vm366, %v365, 0.0
        %368 = vadd.xlane.f32.xlu0 %v367
        %v369 = vpop.xlane.xlu0 %368
        %v370 = vmul.f32 %v369, %v336
        %v371 = vsub.f32 %v365, %v370
        %v372 = vmul.f32 %v371, %v371
        %v373 = vsel %vm366, %v372, 0.0
        %374 = vadd.xlane.f32.xlu0 %v373
        %v375 = vpop.xlane.xlu0 %374
        %v376 = vmul.f32 %v375, %v336
        %v377 = vadd.f32 %v376, 1e-05
        %v378 = vrsqrt.pop %v377
        %v379 = vmul.f32 %v378, %v377
        %v380 = vmul.f32 %v379, %v378
        %v381 = vmul.f32 0.5, %v380
        %v382 = vsub.f32 1.5, %v381
        %v383 = vmul.f32 %v378, %v382
        %vm384 = vweird.f32 %v377
        %vm385 = vweird.f32 %v378
        %vm386 = vmor %vm384, %vm385
        %v387 = vsel %vm386, %v378, %v383
        %v388 = vmul.f32 %v371, %v387
        %v389 = vmul.f32 %v388, %v250
        %v390 = vadd.f32 %v389, %v251
        %391 = vst.msk [vmem:[%s244 + $0x4] sm:$0x1] %vm366, %v390
        %vm392 = vcmask 256000
        %393 = vst.msk [vmem:[%s244 + $0x5] sm:$0x7] %vm392, 0.0
        %s394 = sand.u32 %s159, 1
        %s395 = scalar_lea.sflag [#allocation3], %s394
        %s396 = sand.u32 %s159, 1
        %s397 = smul.addr %s396, 8
        %s398 = scalar_lea.vmem [#allocation2], %s397
        // Predicated region
        $region45: #{tpu_custom_call.1} parent=43 // pred_check
          %p399 = pneg %p169
        $region46: #{tpu_custom_call.1} parent=43 // pred_check_branch
          %401 = sbr.rel (%p399) target = $region48
        $region47: #{tpu_custom_call.1} parent=43 // pred_region
          %403 = vsyncadd %s395, 0
          %s404 = smul.addr %s20, 8
          %s405 = scalar_lea.hbm %s6, %s404
          %s407 = sshll.u32 %s398, 4
          %s408 = int_to_ptr.vmem [resolvable:$true] %s407
          %s409 = sshll.u32 %s405, 4
          %s410 = int_to_ptr.hbm [resolvable:$true] %s409
          %412 = dma.vmem_to_hbm [thread:$0]  %s408, 128, %s410, %s395
        $region48: #{tpu_custom_call.1} parent=43 // pred_fallthru
          _
      $region44: #{tpu_custom_call.1} parent=5 // pred_fallthru
        _
      %p413 = scmp.le.s32.totalorder 2, %s15
      // Predicated region
      $region49: #{tpu_custom_call.1} parent=5 // pred_check
        %p414 = pneg %p413
      $region50: #{tpu_custom_call.1} parent=5 // pred_check_branch
        %416 = sbr.rel (%p414) target = $region52
      $region51: #{tpu_custom_call.1} parent=5 // pred_region
        %s417 = ssub.s32 %s15, 2
        // Predicated region
        $region53: #{tpu_custom_call.1} parent=51 // pred_check
          %p418 = pneg %p175
        $region54: #{tpu_custom_call.1} parent=51 // pred_check_branch
          %420 = sbr.rel (%p418) target = $region56
        $region55: #{tpu_custom_call.1} parent=51 // pred_region
          %s421 = sand.u32 %s160, 1
          %s422 = scalar_lea.sflag [#allocation3], %s421
          %s423 = sand.u32 %s160, 1
          %s424 = smul.addr %s423, 8
          %s425 = scalar_lea.vmem [#allocation2], %s424
          %427 = dma.done %s422, 128
        $region56: #{tpu_custom_call.1} parent=51 // pred_fallthru
          _
      $region52: #{tpu_custom_call.1} parent=5 // pred_fallthru
        _
    $region6: #{tpu_custom_call.1} parent=1 // loop_footer
      %s19 = sadd.s32 1, %s15
    $region7: #{tpu_custom_call.1} parent=1 // loop_footer_branch
      %14 = sbr.rel target = $region3
    $region8: #{tpu_custom_call.1} parent=1 // loop_exit
      _
    %428 = vsyncpa [#allocation3], 1
    %s429 = scalar_lea.sflag [#allocation3], 1
    %430 = vsyncpa %s429, 1

</llo_original>
